<compile_context>
chip_gen: v5e
topology: v5e:2x2
jax: 0.10.0
libtpu: 0.0.40
codegen_flags: <defaults>
</compile_context>

<pallas_src>
import jax
import jax.numpy as jnp
from jax.experimental import pallas as pl
from jax.experimental.pallas import tpu as pltpu

# ---- synthetic model dimensions (deterministic, defined in-script) ----------
N_FEATURES = 4      # dimensionality of x
COND_DIM   = 1      # dimensionality of cond (broadcast path assumes 1)
HIDDEN     = 128    # hidden width of the velocity MLP
IN_DIM     = 1 + N_FEATURES + COND_DIM
BATCH      = 16


def _velocity_mlp_kernel(t_ref, x_ref, cond_ref, mask_ref,
                         w1x_ref, aux_ref, w2_ref, w3_ref,
                         out_ref):
    """Fused 3-layer velocity MLP + mask.  Single invocation, no grid.

    t_ref   : SMEM (1,)                f32   ODE time
    x_ref   : (B, N_FEATURES)          f32
    cond_ref: (B, COND_DIM)            f32
    mask_ref: (B, N_FEATURES)          f32
    w1x_ref : (N_FEATURES, HIDDEN)     bf16  rows of W1 acting on x  (MXU)
    aux_ref : (5, HIDDEN)              f32   [w1_t; w1_cond; b1; b2; b3_pad]
    w2_ref  : (HIDDEN, HIDDEN)         bf16
    w3_ref  : (HIDDEN, N_FEATURES)     bf16
    out_ref : (B, N_FEATURES)          f32
    """
    t = t_ref[0]
    x = x_ref[...]
    cond = cond_ref[...]

    # Unpack the packed f32 rows (static sublane slices of one VMEM buffer).
    w1t = aux_ref[0:1, :]                       # (1, H)  W1 row acting on t
    w1c = aux_ref[1:2, :]                       # (1, H)  W1 row acting on cond
    b1 = aux_ref[2:3, :]                        # (1, H)
    b2 = aux_ref[3:4, :]                        # (1, H)
    b3 = aux_ref[4:5, :][:, 0:N_FEATURES]       # (1, NF) (zero-padded row)

    # Layer 1: split matmul == dense layer on concat([t, x, cond]).
    h = jnp.dot(x.astype(jnp.bfloat16), w1x_ref[...],
                preferred_element_type=jnp.float32)
    # t-term and cond-term are rank-1 -> keep them on the VPU (COND_DIM == 1).
    h = h + t * w1t + cond * w1c + b1
    h = jnp.maximum(h, 0.0)

    # Layer 2
    h = jnp.dot(h.astype(jnp.bfloat16), w2_ref[...],
                preferred_element_type=jnp.float32) + b2
    h = jnp.maximum(h, 0.0)

    # Layer 3 + bias + mask
    o = jnp.dot(h.astype(jnp.bfloat16), w3_ref[...],
                preferred_element_type=jnp.float32) + b3
    out_ref[...] = (o * mask_ref[...]).astype(out_ref.dtype)


def prepare_params(params):
    """One-time weight preparation (split / cast / pack).  NOT per-eval."""
    w1, b1, w2, b2, w3, b3 = params
    w1 = jnp.asarray(w1, jnp.float32)
    w1t = w1[0:1, :]                                         # (1, H)     f32
    w1x = w1[1:1 + N_FEATURES, :].astype(jnp.bfloat16)       # (NF, H)    bf16
    w1c = w1[1 + N_FEATURES:IN_DIM, :]                       # (COND, H)  f32
    b1 = jnp.asarray(b1, jnp.float32).reshape(1, HIDDEN)
    b2 = jnp.asarray(b2, jnp.float32).reshape(1, HIDDEN)
    b3 = jnp.asarray(b3, jnp.float32).reshape(1, N_FEATURES)
    b3_pad = jnp.zeros((1, HIDDEN), jnp.float32).at[:, :N_FEATURES].set(b3)
    # One f32 slab -> one DMA instead of five.
    aux = jnp.concatenate([w1t, w1c, b1, b2, b3_pad], axis=0)  # (5, H) f32
    w2 = jnp.asarray(w2, jnp.bfloat16)                         # (H, H)  bf16
    w3 = jnp.asarray(w3, jnp.bfloat16)                         # (H, NF) bf16
    return (w1x, aux, w2, w3)


def _vmem():
    return pl.BlockSpec(memory_space=pltpu.MemorySpace.VMEM)


@jax.jit
def _forward_impl(t_arr, x, cond, mask, prepared):
    w1x, aux, w2, w3 = prepared
    B = x.shape[0]
    cost = pl.CostEstimate(
        flops=2 * B * (N_FEATURES * HIDDEN + HIDDEN * HIDDEN
                       + HIDDEN * N_FEATURES),
        transcendentals=0,
        bytes_accessed=(x.size + cond.size + mask.size + aux.size
                        + B * N_FEATURES) * 4
                       + (w1x.size + w2.size + w3.size) * 2,
    )
    return pl.pallas_call(
        _velocity_mlp_kernel,
        out_shape=jax.ShapeDtypeStruct((B, N_FEATURES), jnp.float32),
        in_specs=[
            pl.BlockSpec(memory_space=pltpu.MemorySpace.SMEM),  # t
            _vmem(), _vmem(), _vmem(),                          # x, cond, mask
            _vmem(), _vmem(), _vmem(), _vmem(),                  # w1x, aux, w2, w3
        ],
        out_specs=_vmem(),
        cost_estimate=cost,
    )(t_arr, x, cond, mask, w1x, aux, w2, w3)


def ode_wrapper_forward(t, x, prepared_params, mask=None, cond=None):
    """JAX equivalent of ode_wrapper.forward(t, x): model(t, x, mask, cond)."""
    x = jnp.asarray(x, jnp.float32)
    B = x.shape[0]
    cond = (jnp.zeros((B, COND_DIM), jnp.float32) if cond is None
            else jnp.asarray(cond, jnp.float32))
    mask = (jnp.ones((B, N_FEATURES), jnp.float32) if mask is None
            else jnp.asarray(mask, jnp.float32))
    t_arr = jnp.asarray(t, jnp.float32).reshape(1)
    return _forward_impl(t_arr, x, cond, mask, prepared_params)


def _make_params(key):
    k1, k2, k3, k4, k5, k6 = jax.random.split(key, 6)
    w1 = jax.random.normal(k1, (IN_DIM, HIDDEN), jnp.float32) * 0.1
    b1 = jax.random.normal(k2, (HIDDEN,), jnp.float32) * 0.01
    w2 = jax.random.normal(k3, (HIDDEN, HIDDEN), jnp.float32) * 0.1
    b2 = jax.random.normal(k4, (HIDDEN,), jnp.float32) * 0.01
    w3 = jax.random.normal(k5, (HIDDEN, N_FEATURES), jnp.float32) * 0.1
    b3 = jax.random.normal(k6, (1, N_FEATURES), jnp.float32) * 0.01
    return (w1, b1, w2, b2, w3, b3)


def _reference_f32(t, x, params, mask, cond):
    """Pure-f32 reference of the original module's forward."""
    w1, b1, w2, b2, w3, b3 = params
    B = x.shape[0]
    t_col = jnp.broadcast_to(jnp.asarray(t, jnp.float32).reshape(()), (B, 1))
    inp = jnp.concatenate([t_col, x, cond], axis=1)
    h = jnp.maximum(inp @ w1 + b1, 0.0)
    h = jnp.maximum(h @ w2 + b2, 0.0)
    return (h @ w3 + b3) * mask


def _reference_bf16(t, x, prepared, mask, cond):
    """Pure-JAX reference using identical bf16 MXU feeding (exactness check)."""
    w1x, aux, w2, w3 = prepared
    w1t, w1c, b1, b2 = aux[0:1], aux[1:2], aux[2:3], aux[3:4]
    b3 = aux[4:5, 0:N_FEATURES]
    t = jnp.asarray(t, jnp.float32)
    h = jnp.dot(x.astype(jnp.bfloat16), w1x, preferred_element_type=jnp.float32)
    h = jnp.maximum(h + t * w1t + cond * w1c + b1, 0.0)
    h = jnp.maximum(
        jnp.dot(h.astype(jnp.bfloat16), w2, preferred_element_type=jnp.float32)
        + b2, 0.0)
    o = jnp.dot(h.astype(jnp.bfloat16), w3,
                preferred_element_type=jnp.float32) + b3
    return o * mask


if __name__ == "__main__":
    key = jax.random.PRNGKey(0)
    kx, kc, kp = jax.random.split(key, 3)

    x = jax.random.normal(kx, (BATCH, N_FEATURES), jnp.float32)
    cond = jax.random.normal(kc, (BATCH, COND_DIM), jnp.float32)
    mask = jnp.ones((BATCH, N_FEATURES), jnp.float32)
    t = jnp.float32(0.5)

    params = _make_params(kp)
    prepared = prepare_params(params)          # one-time; reused across RHS evals

    out = ode_wrapper_forward(t, x, prepared, mask=mask, cond=cond)
    out = jax.block_until_ready(out)

    ref_exact = _reference_bf16(t, x, prepared, mask, cond)   # same arithmetic
    ref_f32 = _reference_f32(t, x, params, mask, cond)        # original semantics

    assert out.shape == (BATCH, N_FEATURES)
    assert jnp.allclose(out, ref_exact, atol=1e-4, rtol=1e-4)
    assert jnp.allclose(out, ref_f32, atol=5e-2, rtol=5e-2)

    print("KERNEL_OK")
</pallas_src>

<mosaic_0001>
module attributes {stable_mosaic.version = 11 : i64} {
  func.func @_velocity_mlp_kernel(%arg0: memref<1xf32, #tpu.memory_space<smem>>, %arg1: memref<16x4xf32, #tpu.memory_space<vmem>>, %arg2: memref<16x1xf32, #tpu.memory_space<vmem>>, %arg3: memref<16x4xf32, #tpu.memory_space<vmem>>, %arg4: memref<4x128xbf16, #tpu.memory_space<vmem>>, %arg5: memref<5x128xf32, #tpu.memory_space<vmem>>, %arg6: memref<128x128xbf16, #tpu.memory_space<vmem>>, %arg7: memref<128x4xbf16, #tpu.memory_space<vmem>>, %arg8: memref<16x4xf32, #tpu.memory_space<vmem>>) attributes {dimension_semantics = [], scalar_prefetch = 0 : i64, scratch_operands = 0 : i64, tpu.core_type = #tpu.core_type<tc>} {
    %c0 = arith.constant 0 : index
    %0 = memref.load %arg0[%c0] : memref<1xf32, #tpu.memory_space<smem>>
    %c0_0 = arith.constant 0 : index
    %c0_1 = arith.constant 0 : index
    %1 = vector.load %arg1[%c0_0, %c0_1] : memref<16x4xf32, #tpu.memory_space<vmem>>, vector<16x4xf32>
    %c0_2 = arith.constant 0 : index
    %c0_3 = arith.constant 0 : index
    %2 = vector.load %arg2[%c0_2, %c0_3] : memref<16x1xf32, #tpu.memory_space<vmem>>, vector<16x1xf32>
    %c0_4 = arith.constant 0 : index
    %c0_5 = arith.constant 0 : index
    %3 = vector.load %arg5[%c0_4, %c0_5] : memref<5x128xf32, #tpu.memory_space<vmem>>, vector<1x128xf32>
    %c1 = arith.constant 1 : index
    %c0_6 = arith.constant 0 : index
    %4 = vector.load %arg5[%c1, %c0_6] : memref<5x128xf32, #tpu.memory_space<vmem>>, vector<1x128xf32>
    %c2 = arith.constant 2 : index
    %c0_7 = arith.constant 0 : index
    %5 = vector.load %arg5[%c2, %c0_7] : memref<5x128xf32, #tpu.memory_space<vmem>>, vector<1x128xf32>
    %c3 = arith.constant 3 : index
    %c0_8 = arith.constant 0 : index
    %6 = vector.load %arg5[%c3, %c0_8] : memref<5x128xf32, #tpu.memory_space<vmem>>, vector<1x128xf32>
    %c4 = arith.constant 4 : index
    %c0_9 = arith.constant 0 : index
    %7 = vector.load %arg5[%c4, %c0_9] : memref<5x128xf32, #tpu.memory_space<vmem>>, vector<1x128xf32>
    %8 = vector.extract_strided_slice %7 {offsets = [0, 0], sizes = [1, 4], strides = [1, 1]} : vector<1x128xf32> to vector<1x4xf32>
    %9 = arith.truncf %1 : vector<16x4xf32> to vector<16x4xbf16>
    %c0_10 = arith.constant 0 : index
    %c0_11 = arith.constant 0 : index
    %10 = vector.load %arg4[%c0_10, %c0_11] : memref<4x128xbf16, #tpu.memory_space<vmem>>, vector<4x128xbf16>
    %cst = arith.constant dense<0.000000e+00> : vector<16x128xf32>
    %11 = tpu.matmul %9, %10, %cst {dimension_numbers = #tpu.dot_dimension_numbers<[1], [0], [0], [1], [0, 0, 1, 1], [], []>} : vector<16x4xbf16>, vector<4x128xbf16>, vector<16x128xf32> -> vector<16x128xf32>
    %12 = vector.broadcast %0 : f32 to vector<1x128xf32>
    %13 = arith.mulf %12, %3 : vector<1x128xf32>
    %14 = vector.broadcast %13 : vector<1x128xf32> to vector<16x128xf32>
    %15 = arith.addf %11, %14 : vector<16x128xf32>
    %16 = vector.broadcast %2 : vector<16x1xf32> to vector<16x128xf32>
    %17 = vector.broadcast %4 : vector<1x128xf32> to vector<16x128xf32>
    %18 = arith.mulf %16, %17 : vector<16x128xf32>
    %19 = arith.addf %15, %18 : vector<16x128xf32>
    %20 = vector.broadcast %5 : vector<1x128xf32> to vector<16x128xf32>
    %21 = arith.addf %19, %20 : vector<16x128xf32>
    %cst_12 = arith.constant 0.000000e+00 : f32
    %22 = vector.broadcast %cst_12 : f32 to vector<16x128xf32>
    %23 = arith.maximumf %21, %22 : vector<16x128xf32>
    %24 = arith.truncf %23 : vector<16x128xf32> to vector<16x128xbf16>
    %c0_13 = arith.constant 0 : index
    %c0_14 = arith.constant 0 : index
    %25 = vector.load %arg6[%c0_13, %c0_14] : memref<128x128xbf16, #tpu.memory_space<vmem>>, vector<128x128xbf16>
    %cst_15 = arith.constant dense<0.000000e+00> : vector<16x128xf32>
    %26 = tpu.matmul %24, %25, %cst_15 {dimension_numbers = #tpu.dot_dimension_numbers<[1], [0], [0], [1], [0, 0, 1, 1], [], []>} : vector<16x128xbf16>, vector<128x128xbf16>, vector<16x128xf32> -> vector<16x128xf32>
    %27 = vector.broadcast %6 : vector<1x128xf32> to vector<16x128xf32>
    %28 = arith.addf %26, %27 : vector<16x128xf32>
    %cst_16 = arith.constant 0.000000e+00 : f32
    %29 = vector.broadcast %cst_16 : f32 to vector<16x128xf32>
    %30 = arith.maximumf %28, %29 : vector<16x128xf32>
    %31 = arith.truncf %30 : vector<16x128xf32> to vector<16x128xbf16>
    %c0_17 = arith.constant 0 : index
    %c0_18 = arith.constant 0 : index
    %32 = vector.load %arg7[%c0_17, %c0_18] : memref<128x4xbf16, #tpu.memory_space<vmem>>, vector<128x4xbf16>
    %cst_19 = arith.constant dense<0.000000e+00> : vector<16x4xf32>
    %33 = tpu.matmul %31, %32, %cst_19 {dimension_numbers = #tpu.dot_dimension_numbers<[1], [0], [0], [1], [0, 0, 1, 1], [], []>} : vector<16x128xbf16>, vector<128x4xbf16>, vector<16x4xf32> -> vector<16x4xf32>
    %34 = vector.broadcast %8 : vector<1x4xf32> to vector<16x4xf32>
    %35 = arith.addf %33, %34 : vector<16x4xf32>
    %c0_20 = arith.constant 0 : index
    %c0_21 = arith.constant 0 : index
    %36 = vector.load %arg3[%c0_20, %c0_21] : memref<16x4xf32, #tpu.memory_space<vmem>>, vector<16x4xf32>
    %37 = arith.mulf %35, %36 : vector<16x4xf32>
    %c0_22 = arith.constant 0 : index
    %c0_23 = arith.constant 0 : index
    %38 = vector.load %arg8[%c0_22, %c0_23] : memref<16x4xf32, #tpu.memory_space<vmem>>, vector<16x4xf32>
    tpu.vector_store %arg8[%c0_22, %c0_23], %37 {strides = array<i32>} : memref<16x4xf32, #tpu.memory_space<vmem>>, vector<16x4xf32>,
    return
  }
}

</mosaic_0001>

<llo_original>
// kernel: _forward_impl.1
$region0: #{_forward_impl.1}
  #allocation0 [shape = 'u32[]', space=smem, size = 0x4, offset = 0x4, fixed_abs, tag = 'smem constant byte address 0x4 - core index']
  #allocation1 [shape = 'u32[72,128]{1,0:T(1,128)}', space=vmem, size = 0x9000, scoped, tag = 'internal scratch']
  #allocation2 [shape = 'f32[1]{0:T(128)S(6)}', space=smem, size = 0x200, scoped, tag = 'scoped memory for _forward_impl.1']
  %s0 = inlined_call_operand.<no memory space> [shape: f32[1], index: 0, kind: input, shape index: {}]
  %s1 = inlined_call_operand.vmem [shape: f32[16,4], index: 1, kind: input, shape index: {}]
  %s2 = inlined_call_operand.vmem [shape: f32[16,1], index: 2, kind: input, shape index: {}]
  %s3 = inlined_call_operand.vmem [shape: f32[16,4], index: 3, kind: input, shape index: {}]
  %s4 = inlined_call_operand.vmem [shape: bf16[4,128], index: 4, kind: input, shape index: {}]
  %s5 = inlined_call_operand.vmem [shape: f32[5,128], index: 5, kind: input, shape index: {}]
  %s6 = inlined_call_operand.vmem [shape: bf16[128,128], index: 6, kind: input, shape index: {}]
  %s7 = inlined_call_operand.vmem [shape: bf16[128,4], index: 7, kind: input, shape index: {}]
  %s8 = inlined_call_operand.vmem [shape: f32[16,4], index: 8, kind: output, shape index: {}]
  %s9 = sld [smem:[#allocation0]]
  $region42: #{_forward_impl.1} parent=0
    _
  %s11 = ssub.s32 1, %s9
  %s12 = scalar_select 0, %s11, %s9
  %13 = sst [smem:[#allocation2]] %s0
  // Predicated region
  $region2: #{_forward_impl.1} parent=0 // pred_check
    _
  $region3: #{_forward_impl.1} parent=0 // pred_check_branch
    %15 = sbr.rel (0) target = $region5
  $region4: #{_forward_impl.1} parent=0 // pred_region
    _
  $region5: #{_forward_impl.1} parent=0 // pred_fallthru
    _
  // Predicated region
  $region6: #{_forward_impl.1} parent=0 // pred_check
    _
  $region7: #{_forward_impl.1} parent=0 // pred_check_branch
    %17 = sbr.rel (0) target = $region9
  $region8: #{_forward_impl.1} parent=0 // pred_region
    _
  $region9: #{_forward_impl.1} parent=0 // pred_fallthru
    _
  // Predicated region
  $region10: #{_forward_impl.1} parent=0 // pred_check
    _
  $region11: #{_forward_impl.1} parent=0 // pred_check_branch
    %19 = sbr.rel (0) target = $region13
  $region12: #{_forward_impl.1} parent=0 // pred_region
    _
  $region13: #{_forward_impl.1} parent=0 // pred_fallthru
    _
  // Predicated region
  $region14: #{_forward_impl.1} parent=0 // pred_check
    _
  $region15: #{_forward_impl.1} parent=0 // pred_check_branch
    %21 = sbr.rel (0) target = $region17
  $region16: #{_forward_impl.1} parent=0 // pred_region
    _
  $region17: #{_forward_impl.1} parent=0 // pred_fallthru
    _
  // Predicated region
  $region18: #{_forward_impl.1} parent=0 // pred_check
    _
  $region19: #{_forward_impl.1} parent=0 // pred_check_branch
    %23 = sbr.rel (0) target = $region21
  $region20: #{_forward_impl.1} parent=0 // pred_region
    _
  $region21: #{_forward_impl.1} parent=0 // pred_fallthru
    _
  // Predicated region
  $region22: #{_forward_impl.1} parent=0 // pred_check
    _
  $region23: #{_forward_impl.1} parent=0 // pred_check_branch
    %25 = sbr.rel (0) target = $region25
  $region24: #{_forward_impl.1} parent=0 // pred_region
    _
  $region25: #{_forward_impl.1} parent=0 // pred_fallthru
    _
  // Predicated region
  $region26: #{_forward_impl.1} parent=0 // pred_check
    _
  $region27: #{_forward_impl.1} parent=0 // pred_check_branch
    %27 = sbr.rel (0) target = $region29
  $region28: #{_forward_impl.1} parent=0 // pred_region
    _
  $region29: #{_forward_impl.1} parent=0 // pred_fallthru
    _
  // Predicated region
  $region30: #{_forward_impl.1} parent=0 // pred_check
    _
  $region31: #{_forward_impl.1} parent=0 // pred_check_branch
    %29 = sbr.rel (0) target = $region33
  $region32: #{_forward_impl.1} parent=0 // pred_region
    _
  $region33: #{_forward_impl.1} parent=0 // pred_fallthru
    _
  %s31 = sld [smem:[#allocation2]]
  %v32 = vld [vmem:[%s1] sm:$0xff]
  %v33 = vld [vmem:[%s1 + $0x8] sm:$0xff]
  %v34 = vld [vmem:[%s2] sm:$0xff]
  %v35 = vld [vmem:[%s2 + $0x8] sm:$0xff]
  %v36 = vld [vmem:[%s5] sm:$0x1]
  %v37 = vld [vmem:[%s5 + $0x1] sm:$0x1]
  %v38 = vld [vmem:[%s5 + $0x2] sm:$0x1]
  %v39 = vld [vmem:[%s5 + $0x3] sm:$0x1]
  %v40 = vld [vmem:[%s5 + $0x4] sm:$0x1]
  %v41 = vpack.c.bf16 %v33, %v32
  %v42 = vld [vmem:[%s4] sm:$0x3]
  %v43 = vstv %s31
  %v44 = vmul.f32 %v43, %v36
  %v45 = vperm.slane %v44, 0
  %vm46 = vcmask 31744
  %v48 = vsel %vm46, %v41, 0
  %vm50 = vcmask 1041408
  %v52 = vsel %vm50, %v42, 0
  %54 = vmatpush.bf16.msra.mxu0 0
  %55 = vmatpush.bf16.msra.mxu0 0
  %56 = vmatpush.bf16.msra.mxu0 0
  %57 = vmatpush.bf16.msra.mxu0 0
  %58 = vmatpush.bf16.msra.mxu0 0
  %59 = vmatpush.bf16.msra.mxu0 0
  %60 = vmatpush.bf16.msra.mxu0 0
  %61 = vmatpush.bf16.msra.mxu0 %v52
  %62 = vmatmul.bf16.gmra.mxu0 %v48
  %v63 = vpop.f32.mrf.mxu0
  %v64 = vadd.f32 %v45, %v63
  %v65 = vpop.f32.mrf.mxu0
  %v66 = vadd.f32 %v45, %v65
  %67 = vdwg.mxu0
  %69 = vset.pattern.permute.xlu0 0
  %70 = vperm.xlu0 %69, %v34
  %v71 = vpop.permute.xlu0 %70
  %74 = vset.pattern.permute.xlu0 0
  %75 = vperm.xlu0 %74, %v35
  %v76 = vpop.permute.xlu0 %75
  %v78 = vperm.slane %v37, 0
  %v79 = vmul.f32 %v71, %v78
  %v80 = vmul.f32 %v76, %v78
  %v81 = vadd.f32 %v64, %v79
  %v82 = vadd.f32 %v66, %v80
  %v83 = vperm.slane %v38, 0
  %v84 = vadd.f32 %v81, %v83
  %v85 = vadd.f32 %v82, %v83
  %v86 = vmax.f32 %v84, 0.0
  %v87 = vmax.f32 %v85, 0.0
  %v88 = vpack.c.bf16 %v87, %v86
  %v89 = vld [vmem:[%s6] sm:$0xf]
  %v90 = vld [vmem:[%s6 + $0x4] sm:$0xf]
  %v91 = vld [vmem:[%s6 + $0x8] sm:$0xf]
  %v92 = vld [vmem:[%s6 + $0xc] sm:$0xf]
  %v93 = vld [vmem:[%s6 + $0x10] sm:$0xf]
  %v94 = vld [vmem:[%s6 + $0x14] sm:$0xf]
  %v95 = vld [vmem:[%s6 + $0x18] sm:$0xf]
  %v96 = vld [vmem:[%s6 + $0x1c] sm:$0xf]
  %v97 = vld [vmem:[%s6 + $0x20] sm:$0xf]
  %v98 = vld [vmem:[%s6 + $0x24] sm:$0xf]
  %v99 = vld [vmem:[%s6 + $0x28] sm:$0xf]
  %v100 = vld [vmem:[%s6 + $0x2c] sm:$0xf]
  %v101 = vld [vmem:[%s6 + $0x30] sm:$0xf]
  %v102 = vld [vmem:[%s6 + $0x34] sm:$0xf]
  %v103 = vld [vmem:[%s6 + $0x38] sm:$0xf]
  %v104 = vld [vmem:[%s6 + $0x3c] sm:$0xf]
  %v105 = vperm.slane %v39, 0
  %v122 = vunpack.c.l.b16 %v89
  %v123 = vunpack.c.l.b16 %v90
  %v124 = vunpack.c.l.b16 %v91
  %v125 = vunpack.c.l.b16 %v92
  %v126 = vunpack.c.l.b16 %v93
  %v127 = vunpack.c.l.b16 %v94
  %v128 = vunpack.c.l.b16 %v95
  %v129 = vunpack.c.l.b16 %v96
  %v130 = vunpack.c.l.b16 %v97
  %v131 = vunpack.c.l.b16 %v98
  %v132 = vunpack.c.l.b16 %v99
  %v133 = vunpack.c.l.b16 %v100
  %v134 = vunpack.c.l.b16 %v101
  %v135 = vunpack.c.l.b16 %v102
  %v136 = vunpack.c.l.b16 %v103
  %v137 = vunpack.c.l.b16 %v104
  %v138 = vpack.c.b16 %v123, %v122
  %v139 = vpack.c.b16 %v125, %v124
  %v140 = vpack.c.b16 %v127, %v126
  %v141 = vpack.c.b16 %v129, %v128
  %v142 = vpack.c.b16 %v131, %v130
  %v143 = vpack.c.b16 %v133, %v132
  %v144 = vpack.c.b16 %v135, %v134
  %v145 = vpack.c.b16 %v137, %v136
  %154 = vmatpush.bf16.msra.mxu0 %v145
  %155 = vmatpush.bf16.msra.mxu0 %v144
  %156 = vmatpush.bf16.msra.mxu0 %v143
  %157 = vmatpush.bf16.msra.mxu0 %v142
  %158 = vmatpush.bf16.msra.mxu0 %v141
  %159 = vmatpush.bf16.msra.mxu0 %v140
  %160 = vmatpush.bf16.msra.mxu0 %v139
  %161 = vmatpush.bf16.msra.mxu0 %v138
  %162 = vmatmul.bf16.gmra.mxu0 %v88
  %v163 = vpop.f32.mrf.mxu0
  %v164 = vadd.f32 %v105, %v163
  %v165 = vpop.f32.mrf.mxu0
  %v166 = vadd.f32 %v105, %v165
  %167 = vdwg.mxu0
  %v168 = vmax.f32 %v164, 0.0
  %v169 = vmax.f32 %v166, 0.0
  %v170 = vpack.c.bf16 %v169, %v168
  %v171 = vld [vmem:[%s7] sm:$0xf]
  %v172 = vld [vmem:[%s7 + $0x4] sm:$0xf]
  %v173 = vld [vmem:[%s7 + $0x8] sm:$0xf]
  %v174 = vld [vmem:[%s7 + $0xc] sm:$0xf]
  %v175 = vld [vmem:[%s7 + $0x10] sm:$0xf]
  %v176 = vld [vmem:[%s7 + $0x14] sm:$0xf]
  %v177 = vld [vmem:[%s7 + $0x18] sm:$0xf]
  %v178 = vld [vmem:[%s7 + $0x1c] sm:$0xf]
  %v179 = vld [vmem:[%s7 + $0x20] sm:$0xf]
  %v180 = vld [vmem:[%s7 + $0x24] sm:$0xf]
  %v181 = vld [vmem:[%s7 + $0x28] sm:$0xf]
  %v182 = vld [vmem:[%s7 + $0x2c] sm:$0xf]
  %v183 = vld [vmem:[%s7 + $0x30] sm:$0xf]
  %v184 = vld [vmem:[%s7 + $0x34] sm:$0xf]
  %v185 = vld [vmem:[%s7 + $0x38] sm:$0xf]
  %v186 = vld [vmem:[%s7 + $0x3c] sm:$0xf]
  %v187 = vperm.slane %v40, 0
  %v204 = vunpack.c.l.b16 %v171
  %v205 = vunpack.c.l.b16 %v172
  %v206 = vunpack.c.l.b16 %v173
  %v207 = vunpack.c.l.b16 %v174
  %v208 = vunpack.c.l.b16 %v175
  %v209 = vunpack.c.l.b16 %v176
  %v210 = vunpack.c.l.b16 %v177
  %v211 = vunpack.c.l.b16 %v178
  %v212 = vunpack.c.l.b16 %v179
  %v213 = vunpack.c.l.b16 %v180
  %v214 = vunpack.c.l.b16 %v181
  %v215 = vunpack.c.l.b16 %v182
  %v216 = vunpack.c.l.b16 %v183
  %v217 = vunpack.c.l.b16 %v184
  %v218 = vunpack.c.l.b16 %v185
  %v219 = vunpack.c.l.b16 %v186
  %v220 = vpack.c.b16 %v205, %v204
  %v221 = vpack.c.b16 %v207, %v206
  %v222 = vpack.c.b16 %v209, %v208
  %v223 = vpack.c.b16 %v211, %v210
  %v224 = vpack.c.b16 %v213, %v212
  %v225 = vpack.c.b16 %v215, %v214
  %v226 = vpack.c.b16 %v217, %v216
  %v227 = vpack.c.b16 %v219, %v218
  %236 = vmatpush.bf16.msra.mxu0 %v227
  %237 = vmatpush.bf16.msra.mxu0 %v226
  %238 = vmatpush.bf16.msra.mxu0 %v225
  %239 = vmatpush.bf16.msra.mxu0 %v224
  %240 = vmatpush.bf16.msra.mxu0 %v223
  %241 = vmatpush.bf16.msra.mxu0 %v222
  %242 = vmatpush.bf16.msra.mxu0 %v221
  %243 = vmatpush.bf16.msra.mxu0 %v220
  %244 = vmatmul.bf16.gmra.mxu0 %v170
  %v245 = vpop.f32.mrf.mxu0
  %v246 = vadd.f32 %v187, %v245
  %v247 = vpop.f32.mrf.mxu0
  %v248 = vadd.f32 %v187, %v247
  %249 = vdwg.mxu0
  %v250 = vld [vmem:[%s3] sm:$0xff]
  %v251 = vld [vmem:[%s3 + $0x8] sm:$0xff]
  %v252 = vmul.f32 %v246, %v250
  %v253 = vmul.f32 %v248, %v251
  %254 = vst.msk [vmem:[%s8] sm:$0xff] %vm46, %v252
  %255 = vst.msk [vmem:[%s8 + $0x8] sm:$0xff] %vm46, %v253
  // Predicated region
  $region34: #{_forward_impl.1} parent=0 // pred_check
    _
  $region35: #{_forward_impl.1} parent=0 // pred_check_branch
    %257 = sbr.rel (0) target = $region37
  $region36: #{_forward_impl.1} parent=0 // pred_region
    _
  $region37: #{_forward_impl.1} parent=0 // pred_fallthru
    _
  // Predicated region
  $region38: #{_forward_impl.1} parent=0 // pred_check
    _
  $region39: #{_forward_impl.1} parent=0 // pred_check_branch
    %259 = sbr.rel (0) target = $region41
  $region40: #{_forward_impl.1} parent=0 // pred_region
    _
  $region41: #{_forward_impl.1} parent=0 // pred_fallthru
    _

</llo_original>
